<compile_context>
chip_gen: v7x
topology: tpu7x:2x2x1
jax: 0.10.0
libtpu: 0.0.40
codegen_flags: <defaults>
</compile_context>

<pallas_src>
import jax
import jax.numpy as jnp
from jax import lax
from jax.experimental import pallas as pl
from jax.experimental.pallas import tpu as pltpu

FOLD = 8  # edges packed per lane-dense row (8 rows per f32 vreg sublane group)


def _round_up(x, m):
    return (x + m - 1) // m * m


def _mlp_kernel(e_ref, src_ref, dst_ref, we_ref, up_ref, vp_ref, b_ref, o_ref):
    """One edge tile, folded by FOLD along the lane axis.

    e_ref  : (tr, FOLD*d_e)   folded edge features
    src_ref: (tr, FOLD) int32 folded src node ids
    dst_ref: (tr, FOLD) int32 folded dst node ids
    we_ref : (FOLD*d_e, FOLD*out)  block-diag(We^T)
    up_ref : (FOLD*Nu,  FOLD*out)  block-diag(u_feat @ Wu^T)
    vp_ref : (FOLD*Nv,  FOLD*out)  block-diag(v_feat @ Wv^T)
    b_ref  : (1, FOLD*out)         tiled bias
    o_ref  : (tr, FOLD*out)        folded scores
    """
    tr = e_ref.shape[0]
    nu = up_ref.shape[0] // FOLD
    nv = vp_ref.shape[0] // FOLD

    # Edge-feature contribution (MXU).
    acc = jnp.dot(e_ref[...], we_ref[...], preferred_element_type=jnp.float32)

    src = src_ref[...]  # (tr, FOLD) int32
    dst = dst_ref[...]

    # Folded one-hot of the src ids: oh_u[r, j*nu + n] = (src[r, j] == n).
    # Built purely from iota / compare / select; each j writes a disjoint lane block,
    # so accumulating with + is exact.
    lanes_u = lax.broadcasted_iota(jnp.int32, (tr, FOLD * nu), 1)
    oh_u = jnp.zeros((tr, FOLD * nu), jnp.float32)
    for j in range(FOLD):
        tgt = src[:, j:j + 1] + j * nu                     # (tr, 1)
        oh_u = oh_u + jnp.where(lanes_u == tgt, 1.0, 0.0)
    # Gather-and-add of the projected u table == one-hot @ block-diag(u_proj).
    acc = acc + jnp.dot(oh_u, up_ref[...], preferred_element_type=jnp.float32)

    lanes_v = lax.broadcasted_iota(jnp.int32, (tr, FOLD * nv), 1)
    oh_v = jnp.zeros((tr, FOLD * nv), jnp.float32)
    for j in range(FOLD):
        tgt = dst[:, j:j + 1] + j * nv
        oh_v = oh_v + jnp.where(lanes_v == tgt, 1.0, 0.0)
    acc = acc + jnp.dot(oh_v, vp_ref[...], preferred_element_type=jnp.float32)

    o_ref[...] = (acc + b_ref[...]).astype(o_ref.dtype)


def mlp_forward(e_feat, u_feat, v_feat, src_ids, dst_ids, W, b, *, tile_rows=512):
    """Mirror of MLP.forward over the 'forward' edge type.

    W has PyTorch nn.Linear layout [out_dim, in_dim] with in_dim = d_e + d_u + d_v;
    b is [out_dim]. Returns scores of shape [E, out_dim].
    """
    E, d_e = e_feat.shape
    Nu, d_u = u_feat.shape
    Nv, d_v = v_feat.shape
    out_dim = W.shape[0]
    hi = lax.Precision.HIGHEST

    # Split the linear column-wise and pre-project the (small) node tables once.
    We = W[:, :d_e]                                   # (out, d_e)
    Wu = W[:, d_e:d_e + d_u]                          # (out, d_u)
    Wv = W[:, d_e + d_u:]                             # (out, d_v)
    u_proj = jnp.dot(u_feat, Wu.T, precision=hi)      # (Nu, out)
    v_proj = jnp.dot(v_feat, Wv.T, precision=hi)      # (Nv, out)

    # Block-diagonal expansion so 8 edges share one lane-dense row.
    eye = jnp.eye(FOLD, dtype=e_feat.dtype)
    we_blk = jnp.kron(eye, We.T)                      # (FOLD*d_e, FOLD*out)
    up_blk = jnp.kron(eye, u_proj)                    # (FOLD*Nu,  FOLD*out)
    vp_blk = jnp.kron(eye, v_proj)                    # (FOLD*Nv,  FOLD*out)
    b_fold = jnp.tile(b, FOLD).reshape(1, FOLD * out_dim)

    # Fold 8 edges per row and pad E up to a whole number of tiles.
    R = pl.cdiv(E, FOLD)
    tr = min(tile_rows, _round_up(R, 8))              # tile rows (multiple of 8 sublanes)
    n_tiles = pl.cdiv(R, tr)
    R_pad = n_tiles * tr
    E_pad = R_pad * FOLD
    pad = E_pad - E

    e_p = jnp.pad(e_feat, ((0, pad), (0, 0)))
    src_p = jnp.pad(src_ids.astype(jnp.int32), (0, pad))   # pad with node 0 (valid)
    dst_p = jnp.pad(dst_ids.astype(jnp.int32), (0, pad))

    e_fold = e_p.reshape(R_pad, FOLD * d_e)
    src_fold = src_p.reshape(R_pad, FOLD)
    dst_fold = dst_p.reshape(R_pad, FOLD)

    out_fold = pl.pallas_call(
        _mlp_kernel,
        out_shape=jax.ShapeDtypeStruct((R_pad, FOLD * out_dim), e_feat.dtype),
        grid_spec=pltpu.PrefetchScalarGridSpec(
            num_scalar_prefetch=0,
            grid=(n_tiles,),
            in_specs=[
                pl.BlockSpec((tr, FOLD * d_e), lambda i: (i, 0)),
                pl.BlockSpec((tr, FOLD), lambda i: (i, 0)),
                pl.BlockSpec((tr, FOLD), lambda i: (i, 0)),
                # Weights / bias: whole-array, constant index_map -> resident in VMEM.
                pl.BlockSpec((FOLD * d_e, FOLD * out_dim), lambda i: (0, 0)),
                pl.BlockSpec((FOLD * Nu, FOLD * out_dim), lambda i: (0, 0)),
                pl.BlockSpec((FOLD * Nv, FOLD * out_dim), lambda i: (0, 0)),
                pl.BlockSpec((1, FOLD * out_dim), lambda i: (0, 0)),
            ],
            out_specs=pl.BlockSpec((tr, FOLD * out_dim), lambda i: (i, 0)),
        ),
        compiler_params=pltpu.CompilerParams(
            dimension_semantics=("parallel",)),
    )(e_fold, src_fold, dst_fold, we_blk, up_blk, vp_blk, b_fold)

    # Un-fold (free, contiguous row-major reshape) and drop the padding.
    return out_fold.reshape(E_pad, out_dim)[:E]


if __name__ == "__main__":
    key = jax.random.PRNGKey(0)
    k_e, k_u, k_v, k_src, k_dst, k_w, k_b = jax.random.split(key, 7)

    # Small synthetic heterograph: Nu 'u' nodes, Nv 'v' nodes, E 'forward' edges.
    E, Nu, Nv = 256, 16, 16
    d_e, d_u, d_v = 8, 8, 16
    in_dim = d_e + d_u + d_v          # 32
    out_dim = 16

    e_feat = jax.random.normal(k_e, (E, d_e), dtype=jnp.float32)
    u_feat = jax.random.normal(k_u, (Nu, d_u), dtype=jnp.float32)
    v_feat = jax.random.normal(k_v, (Nv, d_v), dtype=jnp.float32)
    src_ids = jax.random.randint(k_src, (E,), 0, Nu)
    dst_ids = jax.random.randint(k_dst, (E,), 0, Nv)

    # Deterministic Linear params (PyTorch layout: W [out_dim, in_dim], b [out_dim]).
    bound = 1.0 / (in_dim ** 0.5)
    W = jax.random.uniform(k_w, (out_dim, in_dim), jnp.float32, -bound, bound)
    b = jax.random.uniform(k_b, (out_dim,), jnp.float32, -bound, bound)

    score = mlp_forward(e_feat, u_feat, v_feat, src_ids, dst_ids, W, b)
    score = jax.block_until_ready(score)

    # Reference check in plain JAX (same semantics as the PyTorch module).
    x_ref = jnp.concatenate([e_feat, u_feat[src_ids], v_feat[dst_ids]], axis=-1)
    ref = jnp.dot(x_ref, W.T, precision=lax.Precision.HIGHEST) + b
    assert score.shape == (E, out_dim)
    assert jnp.allclose(score, ref, atol=1e-4, rtol=1e-4), \
        float(jnp.max(jnp.abs(score - ref)))

    print("KERNEL_OK")
</pallas_src>

<mosaic_0001>
module attributes {stable_mosaic.version = 11 : i64} {
  func.func @_mlp_kernel(%arg0: i32, %arg1: memref<32x64xf32, #tpu.memory_space<vmem>>, %arg2: memref<32x8xi32, #tpu.memory_space<vmem>>, %arg3: memref<32x8xi32, #tpu.memory_space<vmem>>, %arg4: memref<64x128xf32, #tpu.memory_space<vmem>>, %arg5: memref<128x128xf32, #tpu.memory_space<vmem>>, %arg6: memref<128x128xf32, #tpu.memory_space<vmem>>, %arg7: memref<1x128xf32, #tpu.memory_space<vmem>>, %arg8: memref<32x128xf32, #tpu.memory_space<vmem>>) attributes {dimension_semantics = [#tpu.dimension_semantics<parallel>], iteration_bounds = array<i64: 1>, scalar_prefetch = 0 : i64, scratch_operands = 0 : i64, tpu.core_type = #tpu.core_type<tc>, window_params = [{transform_indices = @transform_0, window_bounds = array<i64: 32, 64>}, {transform_indices = @transform_1, window_bounds = array<i64: 32, 8>}, {transform_indices = @transform_2, window_bounds = array<i64: 32, 8>}, {pipeline_mode = #tpu.pipeline_mode<synchronous>, transform_indices = @transform_3, window_bounds = array<i64: 64, 128>}, {pipeline_mode = #tpu.pipeline_mode<synchronous>, transform_indices = @transform_4, window_bounds = array<i64: 128, 128>}, {pipeline_mode = #tpu.pipeline_mode<synchronous>, transform_indices = @transform_5, window_bounds = array<i64: 128, 128>}, {pipeline_mode = #tpu.pipeline_mode<synchronous>, transform_indices = @transform_6, window_bounds = array<i64: 1, 128>}, {transform_indices = @transform_7, window_bounds = array<i64: 32, 128>}]} {
    %c0 = arith.constant 0 : index
    %c0_0 = arith.constant 0 : index
    %0 = vector.load %arg1[%c0, %c0_0] : memref<32x64xf32, #tpu.memory_space<vmem>>, vector<32x64xf32>
    %c0_1 = arith.constant 0 : index
    %c0_2 = arith.constant 0 : index
    %1 = vector.load %arg4[%c0_1, %c0_2] : memref<64x128xf32, #tpu.memory_space<vmem>>, vector<64x128xf32>
    %cst = arith.constant dense<0.000000e+00> : vector<32x128xf32>
    %2 = tpu.matmul %0, %1, %cst {dimension_numbers = #tpu.dot_dimension_numbers<[1], [0], [0], [1], [0, 0, 1, 1], [], []>} : vector<32x64xf32>, vector<64x128xf32>, vector<32x128xf32> -> vector<32x128xf32>
    %c0_3 = arith.constant 0 : index
    %c0_4 = arith.constant 0 : index
    %3 = vector.load %arg2[%c0_3, %c0_4] : memref<32x8xi32, #tpu.memory_space<vmem>>, vector<32x8xi32>
    %c0_5 = arith.constant 0 : index
    %c0_6 = arith.constant 0 : index
    %4 = vector.load %arg3[%c0_5, %c0_6] : memref<32x8xi32, #tpu.memory_space<vmem>>, vector<32x8xi32>
    %5 = tpu.iota {dimensions = array<i32: 1>} : vector<32x128xi32>
    %cst_7 = arith.constant 0.000000e+00 : f32
    %6 = vector.broadcast %cst_7 : f32 to vector<32x128xf32>
    %7 = vector.extract_strided_slice %3 {offsets = [0, 0], sizes = [32, 1], strides = [1, 1]} : vector<32x8xi32> to vector<32x1xi32>
    %c0_i32 = arith.constant 0 : i32
    %8 = vector.broadcast %c0_i32 : i32 to vector<32x1xi32>
    %9 = arith.addi %7, %8 : vector<32x1xi32>
    %10 = vector.broadcast %9 : vector<32x1xi32> to vector<32x128xi32>
    %11 = arith.cmpi eq, %5, %10 : vector<32x128xi32>
    %cst_8 = arith.constant 1.000000e+00 : f32
    %cst_9 = arith.constant 0.000000e+00 : f32
    %12 = vector.broadcast %cst_8 : f32 to vector<32x128xf32>
    %13 = vector.broadcast %cst_9 : f32 to vector<32x128xf32>
    %14 = arith.select %11, %12, %13 : vector<32x128xi1>, vector<32x128xf32>
    %15 = arith.addf %6, %14 : vector<32x128xf32>
    %16 = vector.extract_strided_slice %3 {offsets = [0, 1], sizes = [32, 1], strides = [1, 1]} : vector<32x8xi32> to vector<32x1xi32>
    %c16_i32 = arith.constant 16 : i32
    %17 = vector.broadcast %c16_i32 : i32 to vector<32x1xi32>
    %18 = arith.addi %16, %17 : vector<32x1xi32>
    %19 = vector.broadcast %18 : vector<32x1xi32> to vector<32x128xi32>
    %20 = arith.cmpi eq, %5, %19 : vector<32x128xi32>
    %cst_10 = arith.constant 1.000000e+00 : f32
    %cst_11 = arith.constant 0.000000e+00 : f32
    %21 = vector.broadcast %cst_10 : f32 to vector<32x128xf32>
    %22 = vector.broadcast %cst_11 : f32 to vector<32x128xf32>
    %23 = arith.select %20, %21, %22 : vector<32x128xi1>, vector<32x128xf32>
    %24 = arith.addf %15, %23 : vector<32x128xf32>
    %25 = vector.extract_strided_slice %3 {offsets = [0, 2], sizes = [32, 1], strides = [1, 1]} : vector<32x8xi32> to vector<32x1xi32>
    %c32_i32 = arith.constant 32 : i32
    %26 = vector.broadcast %c32_i32 : i32 to vector<32x1xi32>
    %27 = arith.addi %25, %26 : vector<32x1xi32>
    %28 = vector.broadcast %27 : vector<32x1xi32> to vector<32x128xi32>
    %29 = arith.cmpi eq, %5, %28 : vector<32x128xi32>
    %cst_12 = arith.constant 1.000000e+00 : f32
    %cst_13 = arith.constant 0.000000e+00 : f32
    %30 = vector.broadcast %cst_12 : f32 to vector<32x128xf32>
    %31 = vector.broadcast %cst_13 : f32 to vector<32x128xf32>
    %32 = arith.select %29, %30, %31 : vector<32x128xi1>, vector<32x128xf32>
    %33 = arith.addf %24, %32 : vector<32x128xf32>
    %34 = vector.extract_strided_slice %3 {offsets = [0, 3], sizes = [32, 1], strides = [1, 1]} : vector<32x8xi32> to vector<32x1xi32>
    %c48_i32 = arith.constant 48 : i32
    %35 = vector.broadcast %c48_i32 : i32 to vector<32x1xi32>
    %36 = arith.addi %34, %35 : vector<32x1xi32>
    %37 = vector.broadcast %36 : vector<32x1xi32> to vector<32x128xi32>
    %38 = arith.cmpi eq, %5, %37 : vector<32x128xi32>
    %cst_14 = arith.constant 1.000000e+00 : f32
    %cst_15 = arith.constant 0.000000e+00 : f32
    %39 = vector.broadcast %cst_14 : f32 to vector<32x128xf32>
    %40 = vector.broadcast %cst_15 : f32 to vector<32x128xf32>
    %41 = arith.select %38, %39, %40 : vector<32x128xi1>, vector<32x128xf32>
    %42 = arith.addf %33, %41 : vector<32x128xf32>
    %43 = vector.extract_strided_slice %3 {offsets = [0, 4], sizes = [32, 1], strides = [1, 1]} : vector<32x8xi32> to vector<32x1xi32>
    %c64_i32 = arith.constant 64 : i32
    %44 = vector.broadcast %c64_i32 : i32 to vector<32x1xi32>
    %45 = arith.addi %43, %44 : vector<32x1xi32>
    %46 = vector.broadcast %45 : vector<32x1xi32> to vector<32x128xi32>
    %47 = arith.cmpi eq, %5, %46 : vector<32x128xi32>
    %cst_16 = arith.constant 1.000000e+00 : f32
    %cst_17 = arith.constant 0.000000e+00 : f32
    %48 = vector.broadcast %cst_16 : f32 to vector<32x128xf32>
    %49 = vector.broadcast %cst_17 : f32 to vector<32x128xf32>
    %50 = arith.select %47, %48, %49 : vector<32x128xi1>, vector<32x128xf32>
    %51 = arith.addf %42, %50 : vector<32x128xf32>
    %52 = vector.extract_strided_slice %3 {offsets = [0, 5], sizes = [32, 1], strides = [1, 1]} : vector<32x8xi32> to vector<32x1xi32>
    %c80_i32 = arith.constant 80 : i32
    %53 = vector.broadcast %c80_i32 : i32 to vector<32x1xi32>
    %54 = arith.addi %52, %53 : vector<32x1xi32>
    %55 = vector.broadcast %54 : vector<32x1xi32> to vector<32x128xi32>
    %56 = arith.cmpi eq, %5, %55 : vector<32x128xi32>
    %cst_18 = arith.constant 1.000000e+00 : f32
    %cst_19 = arith.constant 0.000000e+00 : f32
    %57 = vector.broadcast %cst_18 : f32 to vector<32x128xf32>
    %58 = vector.broadcast %cst_19 : f32 to vector<32x128xf32>
    %59 = arith.select %56, %57, %58 : vector<32x128xi1>, vector<32x128xf32>
    %60 = arith.addf %51, %59 : vector<32x128xf32>
    %61 = vector.extract_strided_slice %3 {offsets = [0, 6], sizes = [32, 1], strides = [1, 1]} : vector<32x8xi32> to vector<32x1xi32>
    %c96_i32 = arith.constant 96 : i32
    %62 = vector.broadcast %c96_i32 : i32 to vector<32x1xi32>
    %63 = arith.addi %61, %62 : vector<32x1xi32>
    %64 = vector.broadcast %63 : vector<32x1xi32> to vector<32x128xi32>
    %65 = arith.cmpi eq, %5, %64 : vector<32x128xi32>
    %cst_20 = arith.constant 1.000000e+00 : f32
    %cst_21 = arith.constant 0.000000e+00 : f32
    %66 = vector.broadcast %cst_20 : f32 to vector<32x128xf32>
    %67 = vector.broadcast %cst_21 : f32 to vector<32x128xf32>
    %68 = arith.select %65, %66, %67 : vector<32x128xi1>, vector<32x128xf32>
    %69 = arith.addf %60, %68 : vector<32x128xf32>
    %70 = vector.extract_strided_slice %3 {offsets = [0, 7], sizes = [32, 1], strides = [1, 1]} : vector<32x8xi32> to vector<32x1xi32>
    %c112_i32 = arith.constant 112 : i32
    %71 = vector.broadcast %c112_i32 : i32 to vector<32x1xi32>
    %72 = arith.addi %70, %71 : vector<32x1xi32>
    %73 = vector.broadcast %72 : vector<32x1xi32> to vector<32x128xi32>
    %74 = arith.cmpi eq, %5, %73 : vector<32x128xi32>
    %cst_22 = arith.constant 1.000000e+00 : f32
    %cst_23 = arith.constant 0.000000e+00 : f32
    %75 = vector.broadcast %cst_22 : f32 to vector<32x128xf32>
    %76 = vector.broadcast %cst_23 : f32 to vector<32x128xf32>
    %77 = arith.select %74, %75, %76 : vector<32x128xi1>, vector<32x128xf32>
    %78 = arith.addf %69, %77 : vector<32x128xf32>
    %c0_24 = arith.constant 0 : index
    %c0_25 = arith.constant 0 : index
    %79 = vector.load %arg5[%c0_24, %c0_25] : memref<128x128xf32, #tpu.memory_space<vmem>>, vector<128x128xf32>
    %cst_26 = arith.constant dense<0.000000e+00> : vector<32x128xf32>
    %80 = tpu.matmul %78, %79, %cst_26 {dimension_numbers = #tpu.dot_dimension_numbers<[1], [0], [0], [1], [0, 0, 1, 1], [], []>} : vector<32x128xf32>, vector<128x128xf32>, vector<32x128xf32> -> vector<32x128xf32>
    %81 = arith.addf %2, %80 : vector<32x128xf32>
    %82 = tpu.iota {dimensions = array<i32: 1>} : vector<32x128xi32>
    %cst_27 = arith.constant 0.000000e+00 : f32
    %83 = vector.broadcast %cst_27 : f32 to vector<32x128xf32>
    %84 = vector.extract_strided_slice %4 {offsets = [0, 0], sizes = [32, 1], strides = [1, 1]} : vector<32x8xi32> to vector<32x1xi32>
    %c0_i32_28 = arith.constant 0 : i32
    %85 = vector.broadcast %c0_i32_28 : i32 to vector<32x1xi32>
    %86 = arith.addi %84, %85 : vector<32x1xi32>
    %87 = vector.broadcast %86 : vector<32x1xi32> to vector<32x128xi32>
    %88 = arith.cmpi eq, %82, %87 : vector<32x128xi32>
    %cst_29 = arith.constant 1.000000e+00 : f32
    %cst_30 = arith.constant 0.000000e+00 : f32
    %89 = vector.broadcast %cst_29 : f32 to vector<32x128xf32>
    %90 = vector.broadcast %cst_30 : f32 to vector<32x128xf32>
    %91 = arith.select %88, %89, %90 : vector<32x128xi1>, vector<32x128xf32>
    %92 = arith.addf %83, %91 : vector<32x128xf32>
    %93 = vector.extract_strided_slice %4 {offsets = [0, 1], sizes = [32, 1], strides = [1, 1]} : vector<32x8xi32> to vector<32x1xi32>
    %c16_i32_31 = arith.constant 16 : i32
    %94 = vector.broadcast %c16_i32_31 : i32 to vector<32x1xi32>
    %95 = arith.addi %93, %94 : vector<32x1xi32>
    %96 = vector.broadcast %95 : vector<32x1xi32> to vector<32x128xi32>
    %97 = arith.cmpi eq, %82, %96 : vector<32x128xi32>
    %cst_32 = arith.constant 1.000000e+00 : f32
    %cst_33 = arith.constant 0.000000e+00 : f32
    %98 = vector.broadcast %cst_32 : f32 to vector<32x128xf32>
    %99 = vector.broadcast %cst_33 : f32 to vector<32x128xf32>
    %100 = arith.select %97, %98, %99 : vector<32x128xi1>, vector<32x128xf32>
    %101 = arith.addf %92, %100 : vector<32x128xf32>
    %102 = vector.extract_strided_slice %4 {offsets = [0, 2], sizes = [32, 1], strides = [1, 1]} : vector<32x8xi32> to vector<32x1xi32>
    %c32_i32_34 = arith.constant 32 : i32
    %103 = vector.broadcast %c32_i32_34 : i32 to vector<32x1xi32>
    %104 = arith.addi %102, %103 : vector<32x1xi32>
    %105 = vector.broadcast %104 : vector<32x1xi32> to vector<32x128xi32>
    %106 = arith.cmpi eq, %82, %105 : vector<32x128xi32>
    %cst_35 = arith.constant 1.000000e+00 : f32
    %cst_36 = arith.constant 0.000000e+00 : f32
    %107 = vector.broadcast %cst_35 : f32 to vector<32x128xf32>
    %108 = vector.broadcast %cst_36 : f32 to vector<32x128xf32>
    %109 = arith.select %106, %107, %108 : vector<32x128xi1>, vector<32x128xf32>
    %110 = arith.addf %101, %109 : vector<32x128xf32>
    %111 = vector.extract_strided_slice %4 {offsets = [0, 3], sizes = [32, 1], strides = [1, 1]} : vector<32x8xi32> to vector<32x1xi32>
    %c48_i32_37 = arith.constant 48 : i32
    %112 = vector.broadcast %c48_i32_37 : i32 to vector<32x1xi32>
    %113 = arith.addi %111, %112 : vector<32x1xi32>
    %114 = vector.broadcast %113 : vector<32x1xi32> to vector<32x128xi32>
    %115 = arith.cmpi eq, %82, %114 : vector<32x128xi32>
    %cst_38 = arith.constant 1.000000e+00 : f32
    %cst_39 = arith.constant 0.000000e+00 : f32
    %116 = vector.broadcast %cst_38 : f32 to vector<32x128xf32>
    %117 = vector.broadcast %cst_39 : f32 to vector<32x128xf32>
    %118 = arith.select %115, %116, %117 : vector<32x128xi1>, vector<32x128xf32>
    %119 = arith.addf %110, %118 : vector<32x128xf32>
    %120 = vector.extract_strided_slice %4 {offsets = [0, 4], sizes = [32, 1], strides = [1, 1]} : vector<32x8xi32> to vector<32x1xi32>
    %c64_i32_40 = arith.constant 64 : i32
    %121 = vector.broadcast %c64_i32_40 : i32 to vector<32x1xi32>
    %122 = arith.addi %120, %121 : vector<32x1xi32>
    %123 = vector.broadcast %122 : vector<32x1xi32> to vector<32x128xi32>
    %124 = arith.cmpi eq, %82, %123 : vector<32x128xi32>
    %cst_41 = arith.constant 1.000000e+00 : f32
    %cst_42 = arith.constant 0.000000e+00 : f32
    %125 = vector.broadcast %cst_41 : f32 to vector<32x128xf32>
    %126 = vector.broadcast %cst_42 : f32 to vector<32x128xf32>
    %127 = arith.select %124, %125, %126 : vector<32x128xi1>, vector<32x128xf32>
    %128 = arith.addf %119, %127 : vector<32x128xf32>
    %129 = vector.extract_strided_slice %4 {offsets = [0, 5], sizes = [32, 1], strides = [1, 1]} : vector<32x8xi32> to vector<32x1xi32>
    %c80_i32_43 = arith.constant 80 : i32
    %130 = vector.broadcast %c80_i32_43 : i32 to vector<32x1xi32>
    %131 = arith.addi %129, %130 : vector<32x1xi32>
    %132 = vector.broadcast %131 : vector<32x1xi32> to vector<32x128xi32>
    %133 = arith.cmpi eq, %82, %132 : vector<32x128xi32>
    %cst_44 = arith.constant 1.000000e+00 : f32
    %cst_45 = arith.constant 0.000000e+00 : f32
    %134 = vector.broadcast %cst_44 : f32 to vector<32x128xf32>
    %135 = vector.broadcast %cst_45 : f32 to vector<32x128xf32>
    %136 = arith.select %133, %134, %135 : vector<32x128xi1>, vector<32x128xf32>
    %137 = arith.addf %128, %136 : vector<32x128xf32>
    %138 = vector.extract_strided_slice %4 {offsets = [0, 6], sizes = [32, 1], strides = [1, 1]} : vector<32x8xi32> to vector<32x1xi32>
    %c96_i32_46 = arith.constant 96 : i32
    %139 = vector.broadcast %c96_i32_46 : i32 to vector<32x1xi32>
    %140 = arith.addi %138, %139 : vector<32x1xi32>
    %141 = vector.broadcast %140 : vector<32x1xi32> to vector<32x128xi32>
    %142 = arith.cmpi eq, %82, %141 : vector<32x128xi32>
    %cst_47 = arith.constant 1.000000e+00 : f32
    %cst_48 = arith.constant 0.000000e+00 : f32
    %143 = vector.broadcast %cst_47 : f32 to vector<32x128xf32>
    %144 = vector.broadcast %cst_48 : f32 to vector<32x128xf32>
    %145 = arith.select %142, %143, %144 : vector<32x128xi1>, vector<32x128xf32>
    %146 = arith.addf %137, %145 : vector<32x128xf32>
    %147 = vector.extract_strided_slice %4 {offsets = [0, 7], sizes = [32, 1], strides = [1, 1]} : vector<32x8xi32> to vector<32x1xi32>
    %c112_i32_49 = arith.constant 112 : i32
    %148 = vector.broadcast %c112_i32_49 : i32 to vector<32x1xi32>
    %149 = arith.addi %147, %148 : vector<32x1xi32>
    %150 = vector.broadcast %149 : vector<32x1xi32> to vector<32x128xi32>
    %151 = arith.cmpi eq, %82, %150 : vector<32x128xi32>
    %cst_50 = arith.constant 1.000000e+00 : f32
    %cst_51 = arith.constant 0.000000e+00 : f32
    %152 = vector.broadcast %cst_50 : f32 to vector<32x128xf32>
    %153 = vector.broadcast %cst_51 : f32 to vector<32x128xf32>
    %154 = arith.select %151, %152, %153 : vector<32x128xi1>, vector<32x128xf32>
    %155 = arith.addf %146, %154 : vector<32x128xf32>
    %c0_52 = arith.constant 0 : index
    %c0_53 = arith.constant 0 : index
    %156 = vector.load %arg6[%c0_52, %c0_53] : memref<128x128xf32, #tpu.memory_space<vmem>>, vector<128x128xf32>
    %cst_54 = arith.constant dense<0.000000e+00> : vector<32x128xf32>
    %157 = tpu.matmul %155, %156, %cst_54 {dimension_numbers = #tpu.dot_dimension_numbers<[1], [0], [0], [1], [0, 0, 1, 1], [], []>} : vector<32x128xf32>, vector<128x128xf32>, vector<32x128xf32> -> vector<32x128xf32>
    %158 = arith.addf %81, %157 : vector<32x128xf32>
    %c0_55 = arith.constant 0 : index
    %c0_56 = arith.constant 0 : index
    %159 = vector.load %arg7[%c0_55, %c0_56] : memref<1x128xf32, #tpu.memory_space<vmem>>, vector<1x128xf32>
    %160 = vector.broadcast %159 : vector<1x128xf32> to vector<32x128xf32>
    %161 = arith.addf %158, %160 : vector<32x128xf32>
    %c0_57 = arith.constant 0 : index
    %c0_58 = arith.constant 0 : index
    %162 = vector.load %arg8[%c0_57, %c0_58] : memref<32x128xf32, #tpu.memory_space<vmem>>, vector<32x128xf32>
    tpu.vector_store %arg8[%c0_57, %c0_58], %161 {strides = array<i32>} : memref<32x128xf32, #tpu.memory_space<vmem>>, vector<32x128xf32>,
    return
  }
  func.func @transform_0(%arg0: i32) -> (i32, i32) {
    %c0_i32 = arith.constant 0 : i32
    %c0_i32_0 = arith.constant 0 : i32
    return %arg0, %c0_i32 : i32, i32
  }
  func.func @transform_1(%arg0: i32) -> (i32, i32) {
    %c0_i32 = arith.constant 0 : i32
    %c0_i32_0 = arith.constant 0 : i32
    return %arg0, %c0_i32 : i32, i32
  }
  func.func @transform_2(%arg0: i32) -> (i32, i32) {
    %c0_i32 = arith.constant 0 : i32
    %c0_i32_0 = arith.constant 0 : i32
    return %arg0, %c0_i32 : i32, i32
  }
  func.func @transform_3(%arg0: i32) -> (i32, i32) {
    %c0_i32 = arith.constant 0 : i32
    %c0_i32_0 = arith.constant 0 : i32
    %c0_i32_1 = arith.constant 0 : i32
    return %c0_i32, %c0_i32_0 : i32, i32
  }
  func.func @transform_4(%arg0: i32) -> (i32, i32) {
    %c0_i32 = arith.constant 0 : i32
    %c0_i32_0 = arith.constant 0 : i32
    %c0_i32_1 = arith.constant 0 : i32
    return %c0_i32, %c0_i32_0 : i32, i32
  }
  func.func @transform_5(%arg0: i32) -> (i32, i32) {
    %c0_i32 = arith.constant 0 : i32
    %c0_i32_0 = arith.constant 0 : i32
    %c0_i32_1 = arith.constant 0 : i32
    return %c0_i32, %c0_i32_0 : i32, i32
  }
  func.func @transform_6(%arg0: i32) -> (i32, i32) {
    %c0_i32 = arith.constant 0 : i32
    %c0_i32_0 = arith.constant 0 : i32
    %c0_i32_1 = arith.constant 0 : i32
    return %c0_i32, %c0_i32_0 : i32, i32
  }
  func.func @transform_7(%arg0: i32) -> (i32, i32) {
    %c0_i32 = arith.constant 0 : i32
    %c0_i32_0 = arith.constant 0 : i32
    return %arg0, %c0_i32 : i32, i32
  }
}

</mosaic_0001>

<llo_original>
// kernel: tpu_custom_call.1
$region0: #{tpu_custom_call.1}
  #allocation0 [shape = 'u32[]', space=smem, size = 0x4, offset = 0x4, fixed_abs, tag = 'smem constant byte address 0x4 - core index']
  #allocation1 [shape = 'u32[144,128]{1,0:T(1,128)}', space=vmem, size = 0x12000, scoped, tag = 'internal scratch']
  %s0 = inlined_call_operand.hbm [shape: f32[32,64], index: 0, kind: input, shape index: {}]
  %s1 = inlined_call_operand.vmem [shape: s32[32,8], index: 1, kind: input, shape index: {}]
  %s2 = inlined_call_operand.vmem [shape: s32[32,8], index: 2, kind: input, shape index: {}]
  %s3 = inlined_call_operand.vmem [shape: f32[64,128], index: 3, kind: input, shape index: {}]
  %s4 = inlined_call_operand.hbm [shape: f32[128,128], index: 4, kind: input, shape index: {}]
  %s5 = inlined_call_operand.hbm [shape: f32[128,128], index: 5, kind: input, shape index: {}]
  %s6 = inlined_call_operand.vmem [shape: f32[1,128], index: 6, kind: input, shape index: {}]
  %s7 = inlined_call_operand.hbm [shape: f32[32,128], index: 7, kind: output, shape index: {}]
  %s8 = sld [smem:[#allocation0]]
  $region50: #{tpu_custom_call.1} parent=0
    _
  %s10 = ssub.s32 1, %s8
  %s11 = scalar_select 0, %s10, %s8
  $region1: #{tpu_custom_call.1} parent=0
    #allocation2 [shape = 'u8[16384]{0}', space=vmem, size = 0x4000, scoped, tag = 'input window, operand 0, single buffered']
    #allocation3 [shape = 's32[1]{0}', space=sflag, size = 0x4, scoped, tag = 'scoped memory for tpu_custom_call.1']
    #allocation4 [shape = 's32[1]{0}', space=sflag, size = 0x4, scoped, tag = 'scoped memory for tpu_custom_call.1']
    #allocation5 [shape = 'u8[65536]{0}', space=vmem, size = 0x10000, scoped, tag = 'input window, operand 4, single buffered']
    #allocation6 [shape = 's32[1]{0}', space=sflag, size = 0x4, scoped, tag = 'scoped memory for tpu_custom_call.1']
    #allocation7 [shape = 'u8[65536]{0}', space=vmem, size = 0x10000, scoped, tag = 'input window, operand 5, single buffered']
    #allocation8 [shape = 'u8[16384]{0}', space=vmem, size = 0x4000, scoped, tag = 'output window, operand 0, single buffered']
    %12 = vsyncpa [#allocation3], 0
    %13 = vsyncpa [#allocation6], 0
    %14 = vsyncpa [#allocation4], 0
    // Predicated region
    $region2: #{tpu_custom_call.1} parent=1 // pred_check
      _
    $region3: #{tpu_custom_call.1} parent=1 // pred_check_branch
      %16 = sbr.rel (0) target = $region5
    $region4: #{tpu_custom_call.1} parent=1 // pred_region
      %s18 = ssub.s32 512, 512
      %19 = vsyncadd [#allocation3], %s18
      %s20 = sshll.u32 [#allocation2], 4
      %s21 = int_to_ptr.vmem [resolvable:$true] %s20
      %26 = dma.hbm_to_vmem [thread:$0]  %s0, 512, %s21, [#allocation3], 128, 128, 8
    $region5: #{tpu_custom_call.1} parent=1 // pred_fallthru
      _
    // Predicated region
    $region6: #{tpu_custom_call.1} parent=1 // pred_check
      _
    $region7: #{tpu_custom_call.1} parent=1 // pred_check_branch
      %28 = sbr.rel (0) target = $region9
    $region8: #{tpu_custom_call.1} parent=1 // pred_region
      _
    $region9: #{tpu_custom_call.1} parent=1 // pred_fallthru
      _
    // Predicated region
    $region10: #{tpu_custom_call.1} parent=1 // pred_check
      _
    $region11: #{tpu_custom_call.1} parent=1 // pred_check_branch
      %30 = sbr.rel (0) target = $region13
    $region12: #{tpu_custom_call.1} parent=1 // pred_region
      _
    $region13: #{tpu_custom_call.1} parent=1 // pred_fallthru
      _
    // Predicated region
    $region14: #{tpu_custom_call.1} parent=1 // pred_check
      _
    $region15: #{tpu_custom_call.1} parent=1 // pred_check_branch
      %32 = sbr.rel (0) target = $region17
    $region16: #{tpu_custom_call.1} parent=1 // pred_region
      _
    $region17: #{tpu_custom_call.1} parent=1 // pred_fallthru
      _
    // Predicated region
    $region18: #{tpu_custom_call.1} parent=1 // pred_check
      _
    $region19: #{tpu_custom_call.1} parent=1 // pred_check_branch
      %34 = sbr.rel (0) target = $region21
    $region20: #{tpu_custom_call.1} parent=1 // pred_region
      %s36 = ssub.s32 2048, 2048
      %37 = vsyncadd [#allocation6], %s36
      %s38 = sshll.u32 [#allocation5], 4
      %s39 = int_to_ptr.vmem [resolvable:$true] %s38
      %44 = dma.hbm_to_vmem [thread:$0]  %s4, 2048, %s39, [#allocation6], 128, 128, 8
    $region21: #{tpu_custom_call.1} parent=1 // pred_fallthru
      _
    // Predicated region
    $region22: #{tpu_custom_call.1} parent=1 // pred_check
      _
    $region23: #{tpu_custom_call.1} parent=1 // pred_check_branch
      %46 = sbr.rel (0) target = $region25
    $region24: #{tpu_custom_call.1} parent=1 // pred_region
      %s48 = ssub.s32 2048, 2048
      %49 = vsyncadd [#allocation6], %s48
      %s50 = sshll.u32 [#allocation7], 4
      %s51 = int_to_ptr.vmem [resolvable:$true] %s50
      %56 = dma.hbm_to_vmem [thread:$0]  %s5, 2048, %s51, [#allocation6], 128, 128, 8
    $region25: #{tpu_custom_call.1} parent=1 // pred_fallthru
      _
    // Predicated region
    $region26: #{tpu_custom_call.1} parent=1 // pred_check
      _
    $region27: #{tpu_custom_call.1} parent=1 // pred_check_branch
      %58 = sbr.rel (0) target = $region29
    $region28: #{tpu_custom_call.1} parent=1 // pred_region
      _
    $region29: #{tpu_custom_call.1} parent=1 // pred_fallthru
      _
    // Predicated region
    $region30: #{tpu_custom_call.1} parent=1 // pred_check
      _
    $region31: #{tpu_custom_call.1} parent=1 // pred_check_branch
      %60 = sbr.rel (0) target = $region33
    $region32: #{tpu_custom_call.1} parent=1 // pred_region
      %61 = dma.done [#allocation3], 512
    $region33: #{tpu_custom_call.1} parent=1 // pred_fallthru
      _
    // Predicated region
    $region34: #{tpu_custom_call.1} parent=1 // pred_check
      _
    $region35: #{tpu_custom_call.1} parent=1 // pred_check_branch
      %63 = sbr.rel (0) target = $region37
    $region36: #{tpu_custom_call.1} parent=1 // pred_region
      %64 = dma.done [#allocation6], 2048
    $region37: #{tpu_custom_call.1} parent=1 // pred_fallthru
      _
    // Predicated region
    $region38: #{tpu_custom_call.1} parent=1 // pred_check
      _
    $region39: #{tpu_custom_call.1} parent=1 // pred_check_branch
      %66 = sbr.rel (0) target = $region41
    $region40: #{tpu_custom_call.1} parent=1 // pred_region
      %67 = dma.done [#allocation6], 2048
    $region41: #{tpu_custom_call.1} parent=1 // pred_fallthru
      _
    %v68 = vld [vmem:[#allocation2] sm:$0xff]
    %v69 = vld [vmem:[#allocation2 + $0x8] sm:$0xff]
    %v70 = vld [vmem:[#allocation2 + $0x10] sm:$0xff]
    %v71 = vld [vmem:[#allocation2 + $0x18] sm:$0xff]
    %v72 = vld [vmem:[%s3] sm:$0xff]
    %v73 = vld [vmem:[%s3 + $0x8] sm:$0xff]
    %v74 = vld [vmem:[%s3 + $0x10] sm:$0xff]
    %v75 = vld [vmem:[%s3 + $0x18] sm:$0xff]
    %v76 = vld [vmem:[%s3 + $0x20] sm:$0xff]
    %v77 = vld [vmem:[%s3 + $0x28] sm:$0xff]
    %v78 = vld [vmem:[%s3 + $0x30] sm:$0xff]
    %v79 = vld [vmem:[%s3 + $0x38] sm:$0xff]
    %v80 = vld [vmem:[%s1] sm:$0xff]
    %v81 = vld [vmem:[%s1 + $0x8] sm:$0xff]
    %v82 = vld [vmem:[%s1 + $0x10] sm:$0xff]
    %v83 = vld [vmem:[%s1 + $0x18] sm:$0xff]
    %v84 = vld [vmem:[%s2] sm:$0xff]
    %v85 = vld [vmem:[%s2 + $0x8] sm:$0xff]
    %v86 = vld [vmem:[%s2 + $0x10] sm:$0xff]
    %v87 = vld [vmem:[%s2 + $0x18] sm:$0xff]
    %v88 = vlaneseq
    %v89 = vand.u32 %v88, 127
    %90 = vset.pattern.permute.xlu0 0
    %91 = vperm.xlu0 %90, %v80
    %v92 = vpop.permute.xlu0 %91
    %93 = vset.pattern.permute.xlu0 0
    %94 = vperm.xlu0 %93, %v81
    %v95 = vpop.permute.xlu0 %94
    %96 = vset.pattern.permute.xlu0 0
    %97 = vperm.xlu0 %96, %v82
    %v98 = vpop.permute.xlu0 %97
    %99 = vset.pattern.permute.xlu0 0
    %100 = vperm.xlu0 %99, %v83
    %v101 = vpop.permute.xlu0 %100
    %vm102 = vcmp.eq.s32.totalorder %v89, %v92
    %vm103 = vcmp.eq.s32.totalorder %v89, %v95
    %vm104 = vcmp.eq.s32.totalorder %v89, %v98
    %vm105 = vcmp.eq.s32.totalorder %v89, %v101
    %v106 = vsel %vm102, 1.0, 0.0
    %v107 = vsel %vm103, 1.0, 0.0
    %v108 = vsel %vm104, 1.0, 0.0
    %v109 = vsel %vm105, 1.0, 0.0
    %v110 = vadd.f32 %v106, 0.0
    %v111 = vadd.f32 %v107, 0.0
    %v112 = vadd.f32 %v108, 0.0
    %v113 = vadd.f32 %v109, 0.0
    %v114 = vadd.s32 %v80, 16
    %v115 = vadd.s32 %v81, 16
    %v116 = vadd.s32 %v82, 16
    %v117 = vadd.s32 %v83, 16
    %118 = vset.pattern.permute.xlu0 1
    %119 = vperm.xlu0 %118, %v114
    %v120 = vpop.permute.xlu0 %119
    %121 = vset.pattern.permute.xlu0 1
    %122 = vperm.xlu0 %121, %v115
    %v123 = vpop.permute.xlu0 %122
    %124 = vset.pattern.permute.xlu0 1
    %125 = vperm.xlu0 %124, %v116
    %v126 = vpop.permute.xlu0 %125
    %127 = vset.pattern.permute.xlu0 1
    %128 = vperm.xlu0 %127, %v117
    %v129 = vpop.permute.xlu0 %128
    %vm130 = vcmp.eq.s32.totalorder %v89, %v120
    %vm131 = vcmp.eq.s32.totalorder %v89, %v123
    %vm132 = vcmp.eq.s32.totalorder %v89, %v126
    %vm133 = vcmp.eq.s32.totalorder %v89, %v129
    %v134 = vsel %vm130, 1.0, 0.0
    %v135 = vsel %vm131, 1.0, 0.0
    %v136 = vsel %vm132, 1.0, 0.0
    %v137 = vsel %vm133, 1.0, 0.0
    %v138 = vadd.f32 %v110, %v134
    %v139 = vadd.f32 %v111, %v135
    %v140 = vadd.f32 %v112, %v136
    %v141 = vadd.f32 %v113, %v137
    %v142 = vadd.s32 %v80, 32
    %v143 = vadd.s32 %v81, 32
    %v144 = vadd.s32 %v82, 32
    %v145 = vadd.s32 %v83, 32
    %146 = vset.pattern.permute.xlu0 2
    %147 = vperm.xlu0 %146, %v142
    %v148 = vpop.permute.xlu0 %147
    %149 = vset.pattern.permute.xlu0 2
    %150 = vperm.xlu0 %149, %v143
    %v151 = vpop.permute.xlu0 %150
    %152 = vset.pattern.permute.xlu0 2
    %153 = vperm.xlu0 %152, %v144
    %v154 = vpop.permute.xlu0 %153
    %155 = vset.pattern.permute.xlu0 2
    %156 = vperm.xlu0 %155, %v145
    %v157 = vpop.permute.xlu0 %156
    %vm158 = vcmp.eq.s32.totalorder %v89, %v148
    %vm159 = vcmp.eq.s32.totalorder %v89, %v151
    %vm160 = vcmp.eq.s32.totalorder %v89, %v154
    %vm161 = vcmp.eq.s32.totalorder %v89, %v157
    %v162 = vsel %vm158, 1.0, 0.0
    %v163 = vsel %vm159, 1.0, 0.0
    %v164 = vsel %vm160, 1.0, 0.0
    %v165 = vsel %vm161, 1.0, 0.0
    %v166 = vadd.f32 %v138, %v162
    %v167 = vadd.f32 %v139, %v163
    %v168 = vadd.f32 %v140, %v164
    %v169 = vadd.f32 %v141, %v165
    %v170 = vadd.s32 %v80, 48
    %v171 = vadd.s32 %v81, 48
    %v172 = vadd.s32 %v82, 48
    %v173 = vadd.s32 %v83, 48
    %174 = vset.pattern.permute.xlu0 3
    %175 = vperm.xlu0 %174, %v170
    %v176 = vpop.permute.xlu0 %175
    %177 = vset.pattern.permute.xlu0 3
    %178 = vperm.xlu0 %177, %v171
    %v179 = vpop.permute.xlu0 %178
    %180 = vset.pattern.permute.xlu0 3
    %181 = vperm.xlu0 %180, %v172
    %v182 = vpop.permute.xlu0 %181
    %183 = vset.pattern.permute.xlu0 3
    %184 = vperm.xlu0 %183, %v173
    %v185 = vpop.permute.xlu0 %184
    %vm186 = vcmp.eq.s32.totalorder %v89, %v176
    %vm187 = vcmp.eq.s32.totalorder %v89, %v179
    %vm188 = vcmp.eq.s32.totalorder %v89, %v182
    %vm189 = vcmp.eq.s32.totalorder %v89, %v185
    %v190 = vsel %vm186, 1.0, 0.0
    %v191 = vsel %vm187, 1.0, 0.0
    %v192 = vsel %vm188, 1.0, 0.0
    %v193 = vsel %vm189, 1.0, 0.0
    %v194 = vadd.f32 %v166, %v190
    %v195 = vadd.f32 %v167, %v191
    %v196 = vadd.f32 %v168, %v192
    %v197 = vadd.f32 %v169, %v193
    %v198 = vadd.s32 %v80, 64
    %v199 = vadd.s32 %v81, 64
    %v200 = vadd.s32 %v82, 64
    %v201 = vadd.s32 %v83, 64
    %202 = vset.pattern.permute.xlu0 4
    %203 = vperm.xlu0 %202, %v198
    %v204 = vpop.permute.xlu0 %203
    %205 = vset.pattern.permute.xlu0 4
    %206 = vperm.xlu0 %205, %v199
    %v207 = vpop.permute.xlu0 %206
    %208 = vset.pattern.permute.xlu0 4
    %209 = vperm.xlu0 %208, %v200
    %v210 = vpop.permute.xlu0 %209
    %211 = vset.pattern.permute.xlu0 4
    %212 = vperm.xlu0 %211, %v201
    %v213 = vpop.permute.xlu0 %212
    %vm214 = vcmp.eq.s32.totalorder %v89, %v204
    %vm215 = vcmp.eq.s32.totalorder %v89, %v207
    %vm216 = vcmp.eq.s32.totalorder %v89, %v210
    %vm217 = vcmp.eq.s32.totalorder %v89, %v213
    %v218 = vsel %vm214, 1.0, 0.0
    %v219 = vsel %vm215, 1.0, 0.0
    %v220 = vsel %vm216, 1.0, 0.0
    %v221 = vsel %vm217, 1.0, 0.0
    %v222 = vadd.f32 %v194, %v218
    %v223 = vadd.f32 %v195, %v219
    %v224 = vadd.f32 %v196, %v220
    %v225 = vadd.f32 %v197, %v221
    %v226 = vadd.s32 %v80, 80
    %v227 = vadd.s32 %v81, 80
    %v228 = vadd.s32 %v82, 80
    %v229 = vadd.s32 %v83, 80
    %230 = vset.pattern.permute.xlu0 5
    %231 = vperm.xlu0 %230, %v226
    %v232 = vpop.permute.xlu0 %231
    %233 = vset.pattern.permute.xlu0 5
    %234 = vperm.xlu0 %233, %v227
    %v235 = vpop.permute.xlu0 %234
    %236 = vset.pattern.permute.xlu0 5
    %237 = vperm.xlu0 %236, %v228
    %v238 = vpop.permute.xlu0 %237
    %239 = vset.pattern.permute.xlu0 5
    %240 = vperm.xlu0 %239, %v229
    %v241 = vpop.permute.xlu0 %240
    %vm242 = vcmp.eq.s32.totalorder %v89, %v232
    %vm243 = vcmp.eq.s32.totalorder %v89, %v235
    %vm244 = vcmp.eq.s32.totalorder %v89, %v238
    %vm245 = vcmp.eq.s32.totalorder %v89, %v241
    %v246 = vsel %vm242, 1.0, 0.0
    %v247 = vsel %vm243, 1.0, 0.0
    %v248 = vsel %vm244, 1.0, 0.0
    %v249 = vsel %vm245, 1.0, 0.0
    %v250 = vadd.f32 %v222, %v246
    %v251 = vadd.f32 %v223, %v247
    %v252 = vadd.f32 %v224, %v248
    %v253 = vadd.f32 %v225, %v249
    %v254 = vadd.s32 %v80, 96
    %v255 = vadd.s32 %v81, 96
    %v256 = vadd.s32 %v82, 96
    %v257 = vadd.s32 %v83, 96
    %258 = vset.pattern.permute.xlu0 6
    %259 = vperm.xlu0 %258, %v254
    %v260 = vpop.permute.xlu0 %259
    %261 = vset.pattern.permute.xlu0 6
    %262 = vperm.xlu0 %261, %v255
    %v263 = vpop.permute.xlu0 %262
    %264 = vset.pattern.permute.xlu0 6
    %265 = vperm.xlu0 %264, %v256
    %v266 = vpop.permute.xlu0 %265
    %267 = vset.pattern.permute.xlu0 6
    %268 = vperm.xlu0 %267, %v257
    %v269 = vpop.permute.xlu0 %268
    %vm270 = vcmp.eq.s32.totalorder %v89, %v260
    %vm271 = vcmp.eq.s32.totalorder %v89, %v263
    %vm272 = vcmp.eq.s32.totalorder %v89, %v266
    %vm273 = vcmp.eq.s32.totalorder %v89, %v269
    %v274 = vsel %vm270, 1.0, 0.0
    %v275 = vsel %vm271, 1.0, 0.0
    %v276 = vsel %vm272, 1.0, 0.0
    %v277 = vsel %vm273, 1.0, 0.0
    %v278 = vadd.f32 %v250, %v274
    %v279 = vadd.f32 %v251, %v275
    %v280 = vadd.f32 %v252, %v276
    %v281 = vadd.f32 %v253, %v277
    %v282 = vadd.s32 %v80, 112
    %v283 = vadd.s32 %v81, 112
    %v284 = vadd.s32 %v82, 112
    %v285 = vadd.s32 %v83, 112
    %286 = vset.pattern.permute.xlu0 7
    %287 = vperm.xlu0 %286, %v282
    %v288 = vpop.permute.xlu0 %287
    %289 = vset.pattern.permute.xlu0 7
    %290 = vperm.xlu0 %289, %v283
    %v291 = vpop.permute.xlu0 %290
    %292 = vset.pattern.permute.xlu0 7
    %293 = vperm.xlu0 %292, %v284
    %v294 = vpop.permute.xlu0 %293
    %295 = vset.pattern.permute.xlu0 7
    %296 = vperm.xlu0 %295, %v285
    %v297 = vpop.permute.xlu0 %296
    %vm298 = vcmp.eq.s32.totalorder %v89, %v288
    %vm299 = vcmp.eq.s32.totalorder %v89, %v291
    %vm300 = vcmp.eq.s32.totalorder %v89, %v294
    %vm301 = vcmp.eq.s32.totalorder %v89, %v297
    %v302 = vsel %vm298, 1.0, 0.0
    %v303 = vsel %vm299, 1.0, 0.0
    %v304 = vsel %vm300, 1.0, 0.0
    %v305 = vsel %vm301, 1.0, 0.0
    %v306 = vadd.f32 %v278, %v302
    %v307 = vadd.f32 %v279, %v303
    %v308 = vadd.f32 %v280, %v304
    %v309 = vadd.f32 %v281, %v305
    %v310 = vld [vmem:[#allocation5] sm:$0xff]
    %v311 = vld [vmem:[#allocation5 + $0x8] sm:$0xff]
    %v312 = vld [vmem:[#allocation5 + $0x10] sm:$0xff]
    %v313 = vld [vmem:[#allocation5 + $0x18] sm:$0xff]
    %v314 = vld [vmem:[#allocation5 + $0x20] sm:$0xff]
    %v315 = vld [vmem:[#allocation5 + $0x28] sm:$0xff]
    %v316 = vld [vmem:[#allocation5 + $0x30] sm:$0xff]
    %v317 = vld [vmem:[#allocation5 + $0x38] sm:$0xff]
    %v318 = vld [vmem:[#allocation5 + $0x40] sm:$0xff]
    %v319 = vld [vmem:[#allocation5 + $0x48] sm:$0xff]
    %v320 = vld [vmem:[#allocation5 + $0x50] sm:$0xff]
    %v321 = vld [vmem:[#allocation5 + $0x58] sm:$0xff]
    %v322 = vld [vmem:[#allocation5 + $0x60] sm:$0xff]
    %v323 = vld [vmem:[#allocation5 + $0x68] sm:$0xff]
    %v324 = vld [vmem:[#allocation5 + $0x70] sm:$0xff]
    %v325 = vld [vmem:[#allocation5 + $0x78] sm:$0xff]
    %326 = vmatprep.subr.mxu0 0.0
    %327 = vmatpush1.msra.mxu0 %v310
    %328 = vmatprep.subr.mxu0 0.0
    %329 = vmatpush1.msra.mxu0 %v311
    %330 = vmatprep.subr.mxu0 0.0
    %331 = vmatpush1.msra.mxu0 %v312
    %332 = vmatprep.subr.mxu0 0.0
    %333 = vmatpush1.msra.mxu0 %v313
    %334 = vmatprep.subr.mxu0 0.0
    %335 = vmatpush1.msra.mxu0 %v314
    %336 = vmatprep.subr.mxu0 0.0
    %337 = vmatpush1.msra.mxu0 %v315
    %338 = vmatprep.subr.mxu0 0.0
    %339 = vmatpush1.msra.mxu0 %v316
    %340 = vmatprep.subr.mxu0 0.0
    %341 = vmatpush1.msra.mxu0 %v317
    %342 = vmatprep.subr.mxu0 0.0
    %343 = vmatpush1.msra.mxu0 %v318
    %344 = vmatprep.subr.mxu0 0.0
    %345 = vmatpush1.msra.mxu0 %v319
    %346 = vmatprep.subr.mxu0 0.0
    %347 = vmatpush1.msra.mxu0 %v320
    %348 = vmatprep.subr.mxu0 0.0
    %349 = vmatpush1.msra.mxu0 %v321
    %350 = vmatprep.subr.mxu0 0.0
    %351 = vmatpush1.msra.mxu0 %v322
    %352 = vmatprep.subr.mxu0 0.0
    %353 = vmatpush1.msra.mxu0 %v323
    %354 = vmatprep.subr.mxu0 0.0
    %355 = vmatpush1.msra.mxu0 %v324
    %356 = vmatprep.subr.mxu0 0.0
    %357 = vmatpush1.msra.mxu0 %v325
    %358 = vmatprep.subr.mxu0 0.0
    %359 = vmatpush1.msra.mxu0 0.0
    %360 = vmatprep.subr.mxu0 0.0
    %361 = vmatpush1.msra.mxu0 0.0
    %362 = vmatprep.subr.mxu0 0.0
    %363 = vmatpush1.msra.mxu0 0.0
    %364 = vmatprep.subr.mxu0 0.0
    %365 = vmatpush1.msra.mxu0 0.0
    %366 = vmatprep.subr.mxu0 0.0
    %367 = vmatpush1.msra.mxu0 0.0
    %368 = vmatprep.subr.mxu0 0.0
    %369 = vmatpush1.msra.mxu0 0.0
    %370 = vmatprep.subr.mxu0 0.0
    %371 = vmatpush1.msra.mxu0 0.0
    %372 = vmatprep.subr.mxu0 0.0
    %373 = vmatpush1.msra.mxu0 0.0
    %374 = vmatprep.subr.mxu0 0.0
    %375 = vmatpush1.msra.mxu0 0.0
    %376 = vmatprep.subr.mxu0 0.0
    %377 = vmatpush1.msra.mxu0 0.0
    %378 = vmatprep.subr.mxu0 0.0
    %379 = vmatpush1.msra.mxu0 0.0
    %380 = vmatprep.subr.mxu0 0.0
    %381 = vmatpush1.msra.mxu0 0.0
    %382 = vmatprep.subr.mxu0 0.0
    %383 = vmatpush1.msra.mxu0 0.0
    %384 = vmatprep.subr.mxu0 0.0
    %385 = vmatpush1.msra.mxu0 0.0
    %386 = vmatprep.subr.mxu0 0.0
    %387 = vmatpush1.msra.mxu0 0.0
    %388 = vmatprep.subr.mxu0 0.0
    %389 = vmatpush1.msra.mxu0 0.0
    %390 = vmatprep.mubr.f32.mxu0 0.0
    %391 = vmatmul.mubr.f32.gmra.mrb[0].mxu0 %v306
    %v392 = vpop.f32.mrb[0].mxu0
    %v393 = vadd.f32 0.0, %v392
    %v394 = vpop.f32.mrb[0].mxu0
    %395 = vmatprep.mubr.f32.mxu0 0.0
    %396 = vmatmul.mubr.f32.gmra.mrb[0].mxu0 %v307
    %v397 = vpop.f32.mrb[0].mxu0
    %v398 = vadd.f32 0.0, %v397
    %v399 = vpop.f32.mrb[0].mxu0
    %400 = vmatprep.mubr.f32.mxu0 0.0
    %401 = vmatmul.mubr.f32.gmra.mrb[0].mxu0 %v308
    %v402 = vpop.f32.mrb[0].mxu0
    %v403 = vadd.f32 0.0, %v402
    %v404 = vpop.f32.mrb[0].mxu0
    %405 = vmatprep.mubr.f32.mxu0 0.0
    %406 = vmatmul.mubr.f32.gmra.mrb[0].mxu0 %v309
    %v407 = vpop.f32.mrb[0].mxu0
    %v408 = vadd.f32 0.0, %v407
    %v409 = vpop.f32.mrb[0].mxu0
    %410 = vdwg.mxu0
    %vm411 = vcmask 523264
    %v413 = vsel %vm411, %v68, 0
    %v416 = vsel %vm411, %v69, 0
    %v419 = vsel %vm411, %v70, 0
    %v422 = vsel %vm411, %v71, 0
    %424 = vmatprep.subr.mxu0 0.0
    %425 = vmatpush1.msra.mxu0 %v72
    %426 = vmatprep.subr.mxu0 0.0
    %427 = vmatpush1.msra.mxu0 %v73
    %428 = vmatprep.subr.mxu0 0.0
    %429 = vmatpush1.msra.mxu0 %v74
    %430 = vmatprep.subr.mxu0 0.0
    %431 = vmatpush1.msra.mxu0 %v75
    %432 = vmatprep.subr.mxu0 0.0
    %433 = vmatpush1.msra.mxu0 %v76
    %434 = vmatprep.subr.mxu0 0.0
    %435 = vmatpush1.msra.mxu0 %v77
    %436 = vmatprep.subr.mxu0 0.0
    %437 = vmatpush1.msra.mxu0 %v78
    %438 = vmatprep.subr.mxu0 0.0
    %439 = vmatpush1.msra.mxu0 %v79
    %440 = vmatprep.subr.mxu0 0.0
    %441 = vmatpush1.msra.mxu0 0.0
    %442 = vmatprep.subr.mxu0 0.0
    %443 = vmatpush1.msra.mxu0 0.0
    %444 = vmatprep.subr.mxu0 0.0
    %445 = vmatpush1.msra.mxu0 0.0
    %446 = vmatprep.subr.mxu0 0.0
    %447 = vmatpush1.msra.mxu0 0.0
    %448 = vmatprep.subr.mxu0 0.0
    %449 = vmatpush1.msra.mxu0 0.0
    %450 = vmatprep.subr.mxu0 0.0
    %451 = vmatpush1.msra.mxu0 0.0
    %452 = vmatprep.subr.mxu0 0.0
    %453 = vmatpush1.msra.mxu0 0.0
    %454 = vmatprep.subr.mxu0 0.0
    %455 = vmatpush1.msra.mxu0 0.0
    %456 = vmatprep.subr.mxu0 0.0
    %457 = vmatpush1.msra.mxu0 0.0
    %458 = vmatprep.subr.mxu0 0.0
    %459 = vmatpush1.msra.mxu0 0.0
    %460 = vmatprep.subr.mxu0 0.0
    %461 = vmatpush1.msra.mxu0 0.0
    %462 = vmatprep.subr.mxu0 0.0
    %463 = vmatpush1.msra.mxu0 0.0
    %464 = vmatprep.subr.mxu0 0.0
    %465 = vmatpush1.msra.mxu0 0.0
    %466 = vmatprep.subr.mxu0 0.0
    %467 = vmatpush1.msra.mxu0 0.0
    %468 = vmatprep.subr.mxu0 0.0
    %469 = vmatpush1.msra.mxu0 0.0
    %470 = vmatprep.subr.mxu0 0.0
    %471 = vmatpush1.msra.mxu0 0.0
    %472 = vmatprep.subr.mxu0 0.0
    %473 = vmatpush1.msra.mxu0 0.0
    %474 = vmatprep.subr.mxu0 0.0
    %475 = vmatpush1.msra.mxu0 0.0
    %476 = vmatprep.subr.mxu0 0.0
    %477 = vmatpush1.msra.mxu0 0.0
    %478 = vmatprep.subr.mxu0 0.0
    %479 = vmatpush1.msra.mxu0 0.0
    %480 = vmatprep.subr.mxu0 0.0
    %481 = vmatpush1.msra.mxu0 0.0
    %482 = vmatprep.subr.mxu0 0.0
    %483 = vmatpush1.msra.mxu0 0.0
    %484 = vmatprep.subr.mxu0 0.0
    %485 = vmatpush1.msra.mxu0 0.0
    %486 = vmatprep.subr.mxu0 0.0
    %487 = vmatpush1.msra.mxu0 0.0
    %488 = vmatprep.mubr.f32.mxu0 0.0
    %489 = vmatmul.mubr.f32.gmra.mrb[0].mxu0 %v413
    %v490 = vpop.f32.mrb[0].mxu0
    %v491 = vadd.f32 %v393, %v490
    %v492 = vpop.f32.mrb[0].mxu0
    %493 = vmatprep.mubr.f32.mxu0 0.0
    %494 = vmatmul.mubr.f32.gmra.mrb[0].mxu0 %v416
    %v495 = vpop.f32.mrb[0].mxu0
    %v496 = vadd.f32 %v398, %v495
    %v497 = vpop.f32.mrb[0].mxu0
    %498 = vmatprep.mubr.f32.mxu0 0.0
    %499 = vmatmul.mubr.f32.gmra.mrb[0].mxu0 %v419
    %v500 = vpop.f32.mrb[0].mxu0
    %v501 = vadd.f32 %v403, %v500
    %v502 = vpop.f32.mrb[0].mxu0
    %503 = vmatprep.mubr.f32.mxu0 0.0
    %504 = vmatmul.mubr.f32.gmra.mrb[0].mxu0 %v422
    %v505 = vpop.f32.mrb[0].mxu0
    %v506 = vadd.f32 %v408, %v505
    %v507 = vpop.f32.mrb[0].mxu0
    %508 = vdwg.mxu0
    %509 = vset.pattern.permute.xlu0 0
    %510 = vperm.xlu0 %509, %v84
    %v511 = vpop.permute.xlu0 %510
    %512 = vset.pattern.permute.xlu0 0
    %513 = vperm.xlu0 %512, %v85
    %v514 = vpop.permute.xlu0 %513
    %515 = vset.pattern.permute.xlu0 0
    %516 = vperm.xlu0 %515, %v86
    %v517 = vpop.permute.xlu0 %516
    %518 = vset.pattern.permute.xlu0 0
    %519 = vperm.xlu0 %518, %v87
    %v520 = vpop.permute.xlu0 %519
    %vm521 = vcmp.eq.s32.totalorder %v89, %v511
    %vm522 = vcmp.eq.s32.totalorder %v89, %v514
    %vm523 = vcmp.eq.s32.totalorder %v89, %v517
    %vm524 = vcmp.eq.s32.totalorder %v89, %v520
    %v525 = vsel %vm521, 1.0, 0.0
    %v526 = vsel %vm522, 1.0, 0.0
    %v527 = vsel %vm523, 1.0, 0.0
    %v528 = vsel %vm524, 1.0, 0.0
    %v529 = vadd.f32 %v525, 0.0
    %v530 = vadd.f32 %v526, 0.0
    %v531 = vadd.f32 %v527, 0.0
    %v532 = vadd.f32 %v528, 0.0
    %v533 = vadd.s32 %v84, 16
    %v534 = vadd.s32 %v85, 16
    %v535 = vadd.s32 %v86, 16
    %v536 = vadd.s32 %v87, 16
    %537 = vset.pattern.permute.xlu0 1
    %538 = vperm.xlu0 %537, %v533
    %v539 = vpop.permute.xlu0 %538
    %540 = vset.pattern.permute.xlu0 1
    %541 = vperm.xlu0 %540, %v534
    %v542 = vpop.permute.xlu0 %541
    %543 = vset.pattern.permute.xlu0 1
    %544 = vperm.xlu0 %543, %v535
    %v545 = vpop.permute.xlu0 %544
    %546 = vset.pattern.permute.xlu0 1
    %547 = vperm.xlu0 %546, %v536
    %v548 = vpop.permute.xlu0 %547
    %vm549 = vcmp.eq.s32.totalorder %v89, %v539
    %vm550 = vcmp.eq.s32.totalorder %v89, %v542
    %vm551 = vcmp.eq.s32.totalorder %v89, %v545
    %vm552 = vcmp.eq.s32.totalorder %v89, %v548
    %v553 = vsel %vm549, 1.0, 0.0
    %v554 = vsel %vm550, 1.0, 0.0
    %v555 = vsel %vm551, 1.0, 0.0
    %v556 = vsel %vm552, 1.0, 0.0
    %v557 = vadd.f32 %v529, %v553
    %v558 = vadd.f32 %v530, %v554
    %v559 = vadd.f32 %v531, %v555
    %v560 = vadd.f32 %v532, %v556
    %v561 = vadd.s32 %v84, 32
    %v562 = vadd.s32 %v85, 32
    %v563 = vadd.s32 %v86, 32
    %v564 = vadd.s32 %v87, 32
    %565 = vset.pattern.permute.xlu0 2
    %566 = vperm.xlu0 %565, %v561
    %v567 = vpop.permute.xlu0 %566
    %568 = vset.pattern.permute.xlu0 2
    %569 = vperm.xlu0 %568, %v562
    %v570 = vpop.permute.xlu0 %569
    %571 = vset.pattern.permute.xlu0 2
    %572 = vperm.xlu0 %571, %v563
    %v573 = vpop.permute.xlu0 %572
    %574 = vset.pattern.permute.xlu0 2
    %575 = vperm.xlu0 %574, %v564
    %v576 = vpop.permute.xlu0 %575
    %vm577 = vcmp.eq.s32.totalorder %v89, %v567
    %vm578 = vcmp.eq.s32.totalorder %v89, %v570
    %vm579 = vcmp.eq.s32.totalorder %v89, %v573
    %vm580 = vcmp.eq.s32.totalorder %v89, %v576
    %v581 = vsel %vm577, 1.0, 0.0
    %v582 = vsel %vm578, 1.0, 0.0
    %v583 = vsel %vm579, 1.0, 0.0
    %v584 = vsel %vm580, 1.0, 0.0
    %v585 = vadd.f32 %v557, %v581
    %v586 = vadd.f32 %v558, %v582
    %v587 = vadd.f32 %v559, %v583
    %v588 = vadd.f32 %v560, %v584
    %v589 = vadd.s32 %v84, 48
    %v590 = vadd.s32 %v85, 48
    %v591 = vadd.s32 %v86, 48
    %v592 = vadd.s32 %v87, 48
    %593 = vset.pattern.permute.xlu0 3
    %594 = vperm.xlu0 %593, %v589
    %v595 = vpop.permute.xlu0 %594
    %596 = vset.pattern.permute.xlu0 3
    %597 = vperm.xlu0 %596, %v590
    %v598 = vpop.permute.xlu0 %597
    %599 = vset.pattern.permute.xlu0 3
    %600 = vperm.xlu0 %599, %v591
    %v601 = vpop.permute.xlu0 %600
    %602 = vset.pattern.permute.xlu0 3
    %603 = vperm.xlu0 %602, %v592
    %v604 = vpop.permute.xlu0 %603
    %vm605 = vcmp.eq.s32.totalorder %v89, %v595
    %vm606 = vcmp.eq.s32.totalorder %v89, %v598
    %vm607 = vcmp.eq.s32.totalorder %v89, %v601
    %vm608 = vcmp.eq.s32.totalorder %v89, %v604
    %v609 = vsel %vm605, 1.0, 0.0
    %v610 = vsel %vm606, 1.0, 0.0
    %v611 = vsel %vm607, 1.0, 0.0
    %v612 = vsel %vm608, 1.0, 0.0
    %v613 = vadd.f32 %v585, %v609
    %v614 = vadd.f32 %v586, %v610
    %v615 = vadd.f32 %v587, %v611
    %v616 = vadd.f32 %v588, %v612
    %v617 = vadd.s32 %v84, 64
    %v618 = vadd.s32 %v85, 64
    %v619 = vadd.s32 %v86, 64
    %v620 = vadd.s32 %v87, 64
    %621 = vset.pattern.permute.xlu0 4
    %622 = vperm.xlu0 %621, %v617
    %v623 = vpop.permute.xlu0 %622
    %624 = vset.pattern.permute.xlu0 4
    %625 = vperm.xlu0 %624, %v618
    %v626 = vpop.permute.xlu0 %625
    %627 = vset.pattern.permute.xlu0 4
    %628 = vperm.xlu0 %627, %v619
    %v629 = vpop.permute.xlu0 %628
    %630 = vset.pattern.permute.xlu0 4
    %631 = vperm.xlu0 %630, %v620
    %v632 = vpop.permute.xlu0 %631
    %vm633 = vcmp.eq.s32.totalorder %v89, %v623
    %vm634 = vcmp.eq.s32.totalorder %v89, %v626
    %vm635 = vcmp.eq.s32.totalorder %v89, %v629
    %vm636 = vcmp.eq.s32.totalorder %v89, %v632
    %v637 = vsel %vm633, 1.0, 0.0
    %v638 = vsel %vm634, 1.0, 0.0
    %v639 = vsel %vm635, 1.0, 0.0
    %v640 = vsel %vm636, 1.0, 0.0
    %v641 = vadd.f32 %v613, %v637
    %v642 = vadd.f32 %v614, %v638
    %v643 = vadd.f32 %v615, %v639
    %v644 = vadd.f32 %v616, %v640
    %v645 = vadd.s32 %v84, 80
    %v646 = vadd.s32 %v85, 80
    %v647 = vadd.s32 %v86, 80
    %v648 = vadd.s32 %v87, 80
    %649 = vset.pattern.permute.xlu0 5
    %650 = vperm.xlu0 %649, %v645
    %v651 = vpop.permute.xlu0 %650
    %652 = vset.pattern.permute.xlu0 5
    %653 = vperm.xlu0 %652, %v646
    %v654 = vpop.permute.xlu0 %653
    %655 = vset.pattern.permute.xlu0 5
    %656 = vperm.xlu0 %655, %v647
    %v657 = vpop.permute.xlu0 %656
    %658 = vset.pattern.permute.xlu0 5
    %659 = vperm.xlu0 %658, %v648
    %v660 = vpop.permute.xlu0 %659
    %vm661 = vcmp.eq.s32.totalorder %v89, %v651
    %vm662 = vcmp.eq.s32.totalorder %v89, %v654
    %vm663 = vcmp.eq.s32.totalorder %v89, %v657
    %vm664 = vcmp.eq.s32.totalorder %v89, %v660
    %v665 = vsel %vm661, 1.0, 0.0
    %v666 = vsel %vm662, 1.0, 0.0
    %v667 = vsel %vm663, 1.0, 0.0
    %v668 = vsel %vm664, 1.0, 0.0
    %v669 = vadd.f32 %v641, %v665
    %v670 = vadd.f32 %v642, %v666
    %v671 = vadd.f32 %v643, %v667
    %v672 = vadd.f32 %v644, %v668
    %v673 = vadd.s32 %v84, 96
    %v674 = vadd.s32 %v85, 96
    %v675 = vadd.s32 %v86, 96
    %v676 = vadd.s32 %v87, 96
    %677 = vset.pattern.permute.xlu0 6
    %678 = vperm.xlu0 %677, %v673
    %v679 = vpop.permute.xlu0 %678
    %680 = vset.pattern.permute.xlu0 6
    %681 = vperm.xlu0 %680, %v674
    %v682 = vpop.permute.xlu0 %681
    %683 = vset.pattern.permute.xlu0 6
    %684 = vperm.xlu0 %683, %v675
    %v685 = vpop.permute.xlu0 %684
    %686 = vset.pattern.permute.xlu0 6
    %687 = vperm.xlu0 %686, %v676
    %v688 = vpop.permute.xlu0 %687
    %vm689 = vcmp.eq.s32.totalorder %v89, %v679
    %vm690 = vcmp.eq.s32.totalorder %v89, %v682
    %vm691 = vcmp.eq.s32.totalorder %v89, %v685
    %vm692 = vcmp.eq.s32.totalorder %v89, %v688
    %v693 = vsel %vm689, 1.0, 0.0
    %v694 = vsel %vm690, 1.0, 0.0
    %v695 = vsel %vm691, 1.0, 0.0
    %v696 = vsel %vm692, 1.0, 0.0
    %v697 = vadd.f32 %v669, %v693
    %v698 = vadd.f32 %v670, %v694
    %v699 = vadd.f32 %v671, %v695
    %v700 = vadd.f32 %v672, %v696
    %v701 = vadd.s32 %v84, 112
    %v702 = vadd.s32 %v85, 112
    %v703 = vadd.s32 %v86, 112
    %v704 = vadd.s32 %v87, 112
    %705 = vset.pattern.permute.xlu0 7
    %706 = vperm.xlu0 %705, %v701
    %v707 = vpop.permute.xlu0 %706
    %708 = vset.pattern.permute.xlu0 7
    %709 = vperm.xlu0 %708, %v702
    %v710 = vpop.permute.xlu0 %709
    %711 = vset.pattern.permute.xlu0 7
    %712 = vperm.xlu0 %711, %v703
    %v713 = vpop.permute.xlu0 %712
    %714 = vset.pattern.permute.xlu0 7
    %715 = vperm.xlu0 %714, %v704
    %v716 = vpop.permute.xlu0 %715
    %vm717 = vcmp.eq.s32.totalorder %v89, %v707
    %vm718 = vcmp.eq.s32.totalorder %v89, %v710
    %vm719 = vcmp.eq.s32.totalorder %v89, %v713
    %vm720 = vcmp.eq.s32.totalorder %v89, %v716
    %v721 = vsel %vm717, 1.0, 0.0
    %v722 = vsel %vm718, 1.0, 0.0
    %v723 = vsel %vm719, 1.0, 0.0
    %v724 = vsel %vm720, 1.0, 0.0
    %v725 = vadd.f32 %v697, %v721
    %v726 = vadd.f32 %v698, %v722
    %v727 = vadd.f32 %v699, %v723
    %v728 = vadd.f32 %v700, %v724
    %v729 = vld [vmem:[#allocation7] sm:$0xff]
    %v730 = vld [vmem:[#allocation7 + $0x8] sm:$0xff]
    %v731 = vld [vmem:[#allocation7 + $0x10] sm:$0xff]
    %v732 = vld [vmem:[#allocation7 + $0x18] sm:$0xff]
    %v733 = vld [vmem:[#allocation7 + $0x20] sm:$0xff]
    %v734 = vld [vmem:[#allocation7 + $0x28] sm:$0xff]
    %v735 = vld [vmem:[#allocation7 + $0x30] sm:$0xff]
    %v736 = vld [vmem:[#allocation7 + $0x38] sm:$0xff]
    %v737 = vld [vmem:[#allocation7 + $0x40] sm:$0xff]
    %v738 = vld [vmem:[#allocation7 + $0x48] sm:$0xff]
    %v739 = vld [vmem:[#allocation7 + $0x50] sm:$0xff]
    %v740 = vld [vmem:[#allocation7 + $0x58] sm:$0xff]
    %v741 = vld [vmem:[#allocation7 + $0x60] sm:$0xff]
    %v742 = vld [vmem:[#allocation7 + $0x68] sm:$0xff]
    %v743 = vld [vmem:[#allocation7 + $0x70] sm:$0xff]
    %v744 = vld [vmem:[#allocation7 + $0x78] sm:$0xff]
    %745 = vmatprep.subr.mxu0 0.0
    %746 = vmatpush1.msra.mxu0 %v729
    %747 = vmatprep.subr.mxu0 0.0
    %748 = vmatpush1.msra.mxu0 %v730
    %749 = vmatprep.subr.mxu0 0.0
    %750 = vmatpush1.msra.mxu0 %v731
    %751 = vmatprep.subr.mxu0 0.0
    %752 = vmatpush1.msra.mxu0 %v732
    %753 = vmatprep.subr.mxu0 0.0
    %754 = vmatpush1.msra.mxu0 %v733
    %755 = vmatprep.subr.mxu0 0.0
    %756 = vmatpush1.msra.mxu0 %v734
    %757 = vmatprep.subr.mxu0 0.0
    %758 = vmatpush1.msra.mxu0 %v735
    %759 = vmatprep.subr.mxu0 0.0
    %760 = vmatpush1.msra.mxu0 %v736
    %761 = vmatprep.subr.mxu0 0.0
    %762 = vmatpush1.msra.mxu0 %v737
    %763 = vmatprep.subr.mxu0 0.0
    %764 = vmatpush1.msra.mxu0 %v738
    %765 = vmatprep.subr.mxu0 0.0
    %766 = vmatpush1.msra.mxu0 %v739
    %767 = vmatprep.subr.mxu0 0.0
    %768 = vmatpush1.msra.mxu0 %v740
    %769 = vmatprep.subr.mxu0 0.0
    %770 = vmatpush1.msra.mxu0 %v741
    %771 = vmatprep.subr.mxu0 0.0
    %772 = vmatpush1.msra.mxu0 %v742
    %773 = vmatprep.subr.mxu0 0.0
    %774 = vmatpush1.msra.mxu0 %v743
    %775 = vmatprep.subr.mxu0 0.0
    %776 = vmatpush1.msra.mxu0 %v744
    %777 = vmatprep.subr.mxu0 0.0
    %778 = vmatpush1.msra.mxu0 0.0
    %779 = vmatprep.subr.mxu0 0.0
    %780 = vmatpush1.msra.mxu0 0.0
    %781 = vmatprep.subr.mxu0 0.0
    %782 = vmatpush1.msra.mxu0 0.0
    %783 = vmatprep.subr.mxu0 0.0
    %784 = vmatpush1.msra.mxu0 0.0
    %785 = vmatprep.subr.mxu0 0.0
    %786 = vmatpush1.msra.mxu0 0.0
    %787 = vmatprep.subr.mxu0 0.0
    %788 = vmatpush1.msra.mxu0 0.0
    %789 = vmatprep.subr.mxu0 0.0
    %790 = vmatpush1.msra.mxu0 0.0
    %791 = vmatprep.subr.mxu0 0.0
    %792 = vmatpush1.msra.mxu0 0.0
    %793 = vmatprep.subr.mxu0 0.0
    %794 = vmatpush1.msra.mxu0 0.0
    %795 = vmatprep.subr.mxu0 0.0
    %796 = vmatpush1.msra.mxu0 0.0
    %797 = vmatprep.subr.mxu0 0.0
    %798 = vmatpush1.msra.mxu0 0.0
    %799 = vmatprep.subr.mxu0 0.0
    %800 = vmatpush1.msra.mxu0 0.0
    %801 = vmatprep.subr.mxu0 0.0
    %802 = vmatpush1.msra.mxu0 0.0
    %803 = vmatprep.subr.mxu0 0.0
    %804 = vmatpush1.msra.mxu0 0.0
    %805 = vmatprep.subr.mxu0 0.0
    %806 = vmatpush1.msra.mxu0 0.0
    %807 = vmatprep.subr.mxu0 0.0
    %808 = vmatpush1.msra.mxu0 0.0
    %809 = vmatprep.mubr.f32.mxu0 0.0
    %810 = vmatmul.mubr.f32.gmra.mrb[0].mxu0 %v725
    %v811 = vpop.f32.mrb[0].mxu0
    %v812 = vadd.f32 0.0, %v811
    %v813 = vpop.f32.mrb[0].mxu0
    %814 = vmatprep.mubr.f32.mxu0 0.0
    %815 = vmatmul.mubr.f32.gmra.mrb[0].mxu0 %v726
    %v816 = vpop.f32.mrb[0].mxu0
    %v817 = vadd.f32 0.0, %v816
    %v818 = vpop.f32.mrb[0].mxu0
    %819 = vmatprep.mubr.f32.mxu0 0.0
    %820 = vmatmul.mubr.f32.gmra.mrb[0].mxu0 %v727
    %v821 = vpop.f32.mrb[0].mxu0
    %v822 = vadd.f32 0.0, %v821
    %v823 = vpop.f32.mrb[0].mxu0
    %824 = vmatprep.mubr.f32.mxu0 0.0
    %825 = vmatmul.mubr.f32.gmra.mrb[0].mxu0 %v728
    %v826 = vpop.f32.mrb[0].mxu0
    %v827 = vadd.f32 0.0, %v826
    %v828 = vpop.f32.mrb[0].mxu0
    %829 = vdwg.mxu0
    %v830 = vadd.f32 %v491, %v812
    %v831 = vadd.f32 %v496, %v817
    %v832 = vadd.f32 %v501, %v822
    %v833 = vadd.f32 %v506, %v827
    %v834 = vld [vmem:[%s6] sm:$0x1]
    %v836 = vlaneseq
    %v837 = vshrl.u32 %v836, 7
    %v838 = vsub.s32 0, %v837
    %v839 = vrot.slane %v834, %v838
    %v841 = vadd.f32 %v830, %v839
    %v842 = vadd.f32 %v831, %v839
    %v843 = vadd.f32 %v832, %v839
    %v844 = vadd.f32 %v833, %v839
    %845 = vst [vmem:[#allocation8] sm:$0xff] %v841
    %846 = vst [vmem:[#allocation8 + $0x8] sm:$0xff] %v842
    %847 = vst [vmem:[#allocation8 + $0x10] sm:$0xff] %v843
    %848 = vst [vmem:[#allocation8 + $0x18] sm:$0xff] %v844
    // Predicated region
    $region42: #{tpu_custom_call.1} parent=1 // pred_check
      _
    $region43: #{tpu_custom_call.1} parent=1 // pred_check_branch
      %850 = sbr.rel (0) target = $region45
    $region44: #{tpu_custom_call.1} parent=1 // pred_region
      %s852 = ssub.s32 512, 512
      %853 = vsyncadd [#allocation4], %s852
      %s854 = sshll.u32 [#allocation8], 4
      %s855 = int_to_ptr.vmem [resolvable:$true] %s854
      %860 = dma.vmem_to_hbm [thread:$0]  %s855, 512, %s7, [#allocation4], 128, 128, 8
    $region45: #{tpu_custom_call.1} parent=1 // pred_fallthru
      _
    // Predicated region
    $region46: #{tpu_custom_call.1} parent=1 // pred_check
      _
    $region47: #{tpu_custom_call.1} parent=1 // pred_check_branch
      %862 = sbr.rel (0) target = $region49
    $region48: #{tpu_custom_call.1} parent=1 // pred_region
      %863 = dma.done [#allocation4], 512
    $region49: #{tpu_custom_call.1} parent=1 // pred_fallthru
      _
    %864 = vsyncpa [#allocation3], 1
    %865 = vsyncpa [#allocation6], 1
    %866 = vsyncpa [#allocation4], 1

</llo_original>
